<compile_context>
chip_gen: v7x
topology: tpu7x:2x2x1
jax: 0.10.0
libtpu: 0.0.40
codegen_flags: <defaults>
</compile_context>

<pallas_src>
import functools

import jax
import jax.numpy as jnp
from jax import lax
from jax.experimental import pallas as pl
from jax.experimental.pallas import tpu as pltpu

EPS = 1e-4
ETA = 2  # integer exponent -> repeated multiply

_LANES = 128
_SUBLANES = 8
_TARGET_BLOCK_BYTES = 6 * 1024 * 1024  # per-input-block budget (x2 for double buffering)
_MAX_TILE_ROWS = 4096


def _high_entropy_loss_kernel(x_ref, partial_ref, *, n_rows):
    """One row-tile: per-row entropy -> charbonnier -> masked partial sum."""
    tile_n = x_ref.shape[0]

    x = x_ref[...].astype(jnp.float32)                     # (TILE_N, C)

    # Numerically-stable softmax pieces, reduced along the class/lane axis.
    m = jnp.max(x, axis=-1, keepdims=True)                 # (TILE_N, 1)
    z = x - m                                              # (TILE_N, C)
    e = jnp.exp(z)                                         # (TILE_N, C)  (EUP)
    s = jnp.sum(e, axis=-1, keepdims=True)                 # (TILE_N, 1)
    ez = jnp.sum(e * z, axis=-1, keepdims=True)            # (TILE_N, 1)

    # Entropy identity: -sum_c p*log p = log(s) - sum_c(e*z)/s
    # (avoids full-tile divide `e/s` and full-tile subtract `z - log s`;
    #  the divide below touches only (TILE_N, 1) values -> exact & cheap).
    ent = jnp.log(s) - ez / s                              # (TILE_N, 1)

    # Charbonnier with eta == 2: (ent^2 + eps^2)^2 as repeated multiplies.
    t = ent * ent + jnp.float32(EPS * EPS)
    t = t * t                                              # (TILE_N, 1)

    # Mask rows that fall past the true batch size (padded last block).
    row0 = pl.program_id(0) * tile_n
    row_ids = row0 + lax.broadcasted_iota(jnp.int32, (tile_n, 1), 0)
    t = jnp.where(row_ids < n_rows, t, 0.0)

    partial = jnp.sum(t)                                   # scalar block partial
    # Lane-dense (1, 8, 128) store of the broadcast partial -> one unmasked vst.
    partial_ref[...] = jnp.full(partial_ref.shape, partial, dtype=partial_ref.dtype)


def _choose_tile_n(n, c, itemsize):
    """Largest row tile that fits the per-block VMEM budget, sublane-aligned."""
    sub = {4: 8, 2: 16, 1: 32}.get(itemsize, 8)
    rows = _TARGET_BLOCK_BYTES // max(1, c * itemsize)
    rows = max(sub, (rows // sub) * sub)
    rows = min(rows, _MAX_TILE_ROWS)
    padded_n = ((n + sub - 1) // sub) * sub
    rows = min(rows, max(sub, padded_n))                   # no need to exceed the batch
    return rows


def high_entropy_loss(output, *, tile_n=None):
    """Scalar f32 loss matching HighEntropyLoss.forward (softmax over dim=1)."""
    x = output
    if x.ndim != 2:
        # PyTorch takes softmax over dim=1 for arbitrary rank (e.g. (B,C,H,W));
        # move the class axis last and flatten everything else into rows.
        x = jnp.moveaxis(x, 1, -1)
        x = x.reshape(-1, x.shape[-1])

    n, c = x.shape
    itemsize = jnp.dtype(x.dtype).itemsize
    if tile_n is None:
        tile_n = _choose_tile_n(n, c, itemsize)
    num_blocks = pl.cdiv(n, tile_n)

    kernel = functools.partial(_high_entropy_loss_kernel, n_rows=n)

    cost = pl.CostEstimate(
        flops=6 * n * c,
        transcendentals=n * c + 2 * n,
        bytes_accessed=n * c * itemsize + num_blocks * _SUBLANES * _LANES * 4,
    )

    partials = pl.pallas_call(
        kernel,
        out_shape=jax.ShapeDtypeStruct((num_blocks, _SUBLANES, _LANES), jnp.float32),
        grid=(num_blocks,),
        in_specs=[pl.BlockSpec((tile_n, c), lambda i: (i, 0))],
        out_specs=pl.BlockSpec((1, _SUBLANES, _LANES), lambda i: (i, 0, 0)),
        compiler_params=pltpu.CompilerParams(
            dimension_semantics=("parallel",),
            vmem_limit_bytes=48 * 1024 * 1024,
        ),
        cost_estimate=cost,
    )(x)

    # Tiny final reduction (one value per grid block) in plain JAX; divide by
    # the true number of rows, not grid * tile_n.
    return jnp.sum(partials[:, 0, 0]) / jnp.float32(n)


def _reference(output):
    """Plain-JAX mirror of the PyTorch module (softmax over dim=1)."""
    x = output.astype(jnp.float32)
    pred = jax.nn.softmax(x, axis=1)
    log_pred = jax.nn.log_softmax(x, axis=1)
    ent = -jnp.sum(pred * log_pred, axis=1)
    t = ent ** 2 + EPS ** 2
    t = t ** ETA
    return jnp.mean(t)


if __name__ == "__main__":
    key = jax.random.PRNGKey(0)
    k1, k2, k3 = jax.random.split(key, 3)

    # 1) 2-D logits with N not a multiple of the tile -> exercises grid + row masking.
    x_2d = jax.random.normal(k1, (20, 128), dtype=jnp.float32)
    loss_2d = jax.block_until_ready(high_entropy_loss(x_2d, tile_n=8))
    ref_2d = jax.block_until_ready(_reference(x_2d))
    assert jnp.allclose(loss_2d, ref_2d, rtol=1e-4, atol=1e-6), (loss_2d, ref_2d)

    # 2) 4-D (B, C, H, W) segmentation-style logits, softmax over channel dim=1.
    x_4d = jax.random.normal(k2, (2, 4, 16, 16), dtype=jnp.float32)
    loss_4d = jax.block_until_ready(high_entropy_loss(x_4d, tile_n=128))
    ref_4d = jax.block_until_ready(_reference(x_4d))
    assert jnp.allclose(loss_4d, ref_4d, rtol=1e-4, atol=1e-6), (loss_4d, ref_4d)

    # 3) bf16 logits: DMA'd as bf16 (half the HBM bytes), cast to f32 in-kernel.
    x_bf16 = jax.random.normal(k3, (16, 256), dtype=jnp.bfloat16)
    loss_bf = jax.block_until_ready(high_entropy_loss(x_bf16))
    ref_bf = jax.block_until_ready(_reference(x_bf16))
    assert jnp.allclose(loss_bf, ref_bf, rtol=1e-4, atol=1e-6), (loss_bf, ref_bf)

    print("KERNEL_OK")
</pallas_src>

<mosaic_0001>
module attributes {stable_mosaic.version = 11 : i64} {
  func.func @_high_entropy_loss_kernel(%arg0: i32, %arg1: memref<8x128xf32, #tpu.memory_space<vmem>>, %arg2: memref<1x8x128xf32, #tpu.memory_space<vmem>>) attributes {dimension_semantics = [#tpu.dimension_semantics<parallel>], iteration_bounds = array<i64: 3>, scalar_prefetch = 0 : i64, scratch_operands = 0 : i64, tpu.core_type = #tpu.core_type<tc>, window_params = [{transform_indices = @transform_0, window_bounds = array<i64: 8, 128>}, {transform_indices = @transform_1, window_bounds = array<i64: 1, 8, 128>}]} {
    %c0 = arith.constant 0 : index
    %c0_0 = arith.constant 0 : index
    %0 = vector.load %arg1[%c0, %c0_0] : memref<8x128xf32, #tpu.memory_space<vmem>>, vector<8x128xf32>
    %cst = arith.constant dense<0xFF800000> : vector<8xf32>
    %1 = vector.multi_reduction <maximumf>, %0, %cst [1] : vector<8x128xf32> to vector<8xf32>
    %2 = vector.shape_cast %1 : vector<8xf32> to vector<8x1xf32>
    %3 = vector.broadcast %2 : vector<8x1xf32> to vector<8x128xf32>
    %4 = arith.subf %0, %3 : vector<8x128xf32>
    %5 = math.exp %4 : vector<8x128xf32>
    %cst_1 = arith.constant dense<0.000000e+00> : vector<8xf32>
    %6 = vector.multi_reduction <add>, %5, %cst_1 [1] : vector<8x128xf32> to vector<8xf32>
    %7 = vector.shape_cast %6 : vector<8xf32> to vector<8x1xf32>
    %8 = arith.mulf %5, %4 : vector<8x128xf32>
    %cst_2 = arith.constant dense<0.000000e+00> : vector<8xf32>
    %9 = vector.multi_reduction <add>, %8, %cst_2 [1] : vector<8x128xf32> to vector<8xf32>
    %10 = vector.shape_cast %9 : vector<8xf32> to vector<8x1xf32>
    %11 = math.log %7 : vector<8x1xf32>
    %12 = arith.divf %10, %7 : vector<8x1xf32>
    %13 = arith.subf %11, %12 : vector<8x1xf32>
    %14 = arith.mulf %13, %13 : vector<8x1xf32>
    %cst_3 = arith.constant 9.99999993E-9 : f32
    %15 = vector.broadcast %cst_3 : f32 to vector<8x1xf32>
    %16 = arith.addf %14, %15 : vector<8x1xf32>
    %17 = arith.mulf %16, %16 : vector<8x1xf32>
    %c8_i32 = arith.constant 8 : i32
    %18 = arith.muli %arg0, %c8_i32 : i32
    %19 = tpu.iota {dimensions = array<i32: 0>} : vector<8x1xi32>
    %20 = vector.broadcast %18 : i32 to vector<8x1xi32>
    %21 = arith.addi %20, %19 : vector<8x1xi32>
    %c20_i32 = arith.constant 20 : i32
    %22 = vector.broadcast %c20_i32 : i32 to vector<8x1xi32>
    %23 = arith.cmpi slt, %21, %22 : vector<8x1xi32>
    %cst_4 = arith.constant 0.000000e+00 : f32
    %24 = vector.broadcast %cst_4 : f32 to vector<8x1xf32>
    %25 = arith.select %23, %17, %24 : vector<8x1xi1>, vector<8x1xf32>
    %26 = vector.shape_cast %25 : vector<8x1xf32> to vector<1x8x1xf32>
    %cst_5 = arith.constant dense<0.000000e+00> : vector<1xf32>
    %27 = vector.multi_reduction <add>, %26, %cst_5 [1, 2] : vector<1x8x1xf32> to vector<1xf32>
    %28 = vector.shape_cast %27 : vector<1xf32> to vector<1x1x1xf32>
    %29 = vector.extract %28[0, 0, 0] : f32 from vector<1x1x1xf32>
    %30 = vector.broadcast %29 : f32 to vector<1x8x128xf32>
    %c0_6 = arith.constant 0 : index
    %c0_7 = arith.constant 0 : index
    %c0_8 = arith.constant 0 : index
    %31 = vector.load %arg2[%c0_6, %c0_7, %c0_8] : memref<1x8x128xf32, #tpu.memory_space<vmem>>, vector<1x8x128xf32>
    tpu.vector_store %arg2[%c0_6, %c0_7, %c0_8], %30 {strides = array<i32>} : memref<1x8x128xf32, #tpu.memory_space<vmem>>, vector<1x8x128xf32>,
    return
  }
  func.func @transform_0(%arg0: i32) -> (i32, i32) {
    %c0_i32 = arith.constant 0 : i32
    %c0_i32_0 = arith.constant 0 : i32
    return %arg0, %c0_i32 : i32, i32
  }
  func.func @transform_1(%arg0: i32) -> (i32, i32, i32) {
    %c0_i32 = arith.constant 0 : i32
    %c0_i32_0 = arith.constant 0 : i32
    %c0_i32_1 = arith.constant 0 : i32
    return %arg0, %c0_i32, %c0_i32_0 : i32, i32, i32
  }
}

</mosaic_0001>

<llo_original>
// kernel: tpu_custom_call.1
$region0: #{tpu_custom_call.1}
  #allocation0 [shape = 'u32[]', space=smem, size = 0x4, offset = 0x4, fixed_abs, tag = 'smem constant byte address 0x4 - core index']
  #allocation1 [shape = 'u32[144,128]{1,0:T(1,128)}', space=vmem, size = 0x12000, scoped, tag = 'internal scratch']
  %s0 = inlined_call_operand.hbm [shape: f32[20,128], index: 0, kind: input, shape index: {}]
  %s1 = inlined_call_operand.hbm [shape: f32[3,8,128], index: 1, kind: output, shape index: {}]
  %s2 = sld [smem:[#allocation0]]
  $region41: #{tpu_custom_call.1} parent=0
    _
  %s4 = ssub.s32 1, %s2
  %s5 = scalar_select 0, %s4, %s2
  $region1: #{tpu_custom_call.1} parent=0
    #allocation2 [shape = 'u8[8192]{0}', space=vmem, size = 0x2000, scoped, tag = 'input window, operand 0']
    #allocation3 [shape = 's32[2]{0}', space=sflag, size = 0x8, scoped, tag = 'scoped memory for tpu_custom_call.1']
    #allocation4 [shape = 's32[2]{0}', space=sflag, size = 0x8, scoped, tag = 'scoped memory for tpu_custom_call.1']
    #allocation5 [shape = 'u8[8192]{0}', space=vmem, size = 0x2000, scoped, tag = 'output window, operand 0']
    %6 = vsyncpa [#allocation3], 0
    %s7 = scalar_lea.sflag [#allocation3], 1
    %8 = vsyncpa %s7, 0
    %9 = vsyncpa [#allocation4], 0
    %s10 = scalar_lea.sflag [#allocation4], 1
    %11 = vsyncpa %s10, 0
    loop: start=0, step=1, limit=5
    $region2: #{tpu_custom_call.1} parent=1 // loop_pre_header
      _
    $region3: #{tpu_custom_call.1} parent=1 // loop_header
      %s13 = sphi 0, %s17
      %p14 = scmp.ge.s32.totalorder %s13, 5
      %s23 = sphi 0, %s25
      %s26 = sphi 0, %s23
      %s27 = sphi 0, %s26
      %s43 = sphi 0, %s27
      %s49 = sphi 0, %s51
      %s52 = sphi 0, %s49
      %s53 = sphi 0, %s52
      %s69 = sphi 0, %s53
    $region4: #{tpu_custom_call.1} parent=1 // loop_header_branch
      %16 = sbr.rel (%p14) target = $region8
    $region5: #{tpu_custom_call.1} parent=1 // loop_body
      %s18 = ssub.s32 %s13, 1
      %s19 = ssub.s32 %s13, 2
      %s20 = sadd.s32 %s13, 1
      %s21 = ssub.s32 %s13, %s20
      %p22 = scmp.eq.s32.totalorder %s21, 0
      %s24 = sadd.s32 %s23, 1
      %s25 = scalar_select %p22, %s23, %s24
      %p28 = pneg %p22
      %p29 = scmp.eq.s32.totalorder %s13, 2
      %p30 = por %p28, %p29
      %p31 = scmp.ne.s32.totalorder %s23, %s26
      %p32 = scmp.eq.s32.totalorder %s13, 0
      %p33 = por %p31, %p32
      %p34 = scmp.ne.s32.totalorder %s23, %s26
      %p35 = scmp.eq.s32.totalorder %s18, 2
      %p36 = por %p34, %p35
      %p37 = scmp.ne.s32.totalorder %s26, %s27
      %p38 = scmp.eq.s32.totalorder %s18, 0
      %p39 = por %p37, %p38
      %p40 = scmp.ne.s32.totalorder %s26, %s27
      %p41 = scmp.eq.s32.totalorder %s19, 2
      %p42 = por %p40, %p41
      %p44 = scmp.ne.s32.totalorder %s27, %s43
      %p45 = scmp.eq.s32.totalorder %s19, 0
      %p46 = por %p44, %p45
      %s47 = ssub.s32 %s13, %s20
      %p48 = scmp.eq.s32.totalorder %s47, 0
      %s50 = sadd.s32 %s49, 1
      %s51 = scalar_select %p48, %s49, %s50
      %p54 = pneg %p48
      %p55 = scmp.eq.s32.totalorder %s13, 2
      %p56 = por %p54, %p55
      %p57 = scmp.ne.s32.totalorder %s49, %s52
      %p58 = scmp.eq.s32.totalorder %s13, 0
      %p59 = por %p57, %p58
      %p60 = scmp.ne.s32.totalorder %s49, %s52
      %p61 = scmp.eq.s32.totalorder %s18, 2
      %p62 = por %p60, %p61
      %p63 = scmp.ne.s32.totalorder %s52, %s53
      %p64 = scmp.eq.s32.totalorder %s18, 0
      %p65 = por %p63, %p64
      %p66 = scmp.ne.s32.totalorder %s52, %s53
      %p67 = scmp.eq.s32.totalorder %s19, 2
      %p68 = por %p66, %p67
      %p70 = scmp.ne.s32.totalorder %s53, %s69
      %p71 = scmp.eq.s32.totalorder %s19, 0
      %p72 = por %p70, %p71
      %p73 = scmp.le.s32.totalorder 1, %s13
      %p74 = scmp.lt.s32.totalorder %s13, 4
      %p75 = pnand %p73, %p74
      %p76 = pneg %p75
      // Predicated region
      $region9: #{tpu_custom_call.1} parent=5 // pred_check
        _
      $region10: #{tpu_custom_call.1} parent=5 // pred_check_branch
        %78 = sbr.rel (%p75) target = $region12
      $region11: #{tpu_custom_call.1} parent=5 // pred_region
        %s79 = ssub.s32 %s13, 1
      $region12: #{tpu_custom_call.1} parent=5 // pred_fallthru
        _
      %p80 = scmp.lt.s32.totalorder %s13, 3
      // Predicated region
      $region13: #{tpu_custom_call.1} parent=5 // pred_check
        %p81 = pneg %p80
      $region14: #{tpu_custom_call.1} parent=5 // pred_check_branch
        %83 = sbr.rel (%p81) target = $region16
      $region15: #{tpu_custom_call.1} parent=5 // pred_region
        // Predicated region
        $region17: #{tpu_custom_call.1} parent=15 // pred_check
          %p84 = pneg %p33
        $region18: #{tpu_custom_call.1} parent=15 // pred_check_branch
          %86 = sbr.rel (%p84) target = $region20
        $region19: #{tpu_custom_call.1} parent=15 // pred_region
          %s87 = sand.u32 %s23, 1
          %s88 = scalar_lea.sflag [#allocation3], %s87
          %s89 = sand.u32 %s23, 1
          %s90 = smul.addr %s89, 8
          %s91 = scalar_lea.vmem [#allocation2], %s90
          %s93 = ssub.s32 128, 128
          %94 = vsyncadd %s88, %s93
          %s95 = smul.addr %s13, 128
          %s96 = scalar_lea.hbm %s0, %s95
          %s98 = sshll.u32 %s91, 4
          %s99 = int_to_ptr.vmem [resolvable:$true] %s98
          %101 = dma.hbm_to_vmem [thread:$0]  %s96, 128, %s99, %s88
        $region20: #{tpu_custom_call.1} parent=15 // pred_fallthru
          _
      $region16: #{tpu_custom_call.1} parent=5 // pred_fallthru
        _
      %p102 = scmp.le.s32.totalorder 1, %s13
      %p103 = scmp.lt.s32.totalorder %s13, 4
      %p104 = pnand %p102, %p103
      %p105 = pneg %p104
      // Predicated region
      $region21: #{tpu_custom_call.1} parent=5 // pred_check
        _
      $region22: #{tpu_custom_call.1} parent=5 // pred_check_branch
        %107 = sbr.rel (%p104) target = $region24
      $region23: #{tpu_custom_call.1} parent=5 // pred_region
        %s108 = ssub.s32 %s13, 1
        %s109 = sand.u32 %s26, 1
        %s110 = scalar_lea.sflag [#allocation3], %s109
        %s111 = sand.u32 %s26, 1
        %s112 = smul.addr %s111, 8
        %s113 = scalar_lea.vmem [#allocation2], %s112
        // Predicated region
        $region25: #{tpu_custom_call.1} parent=23 // pred_check
          %p114 = pneg %p39
        $region26: #{tpu_custom_call.1} parent=23 // pred_check_branch
          %116 = sbr.rel (%p114) target = $region28
        $region27: #{tpu_custom_call.1} parent=23 // pred_region
          %117 = dma.done %s110, 128
        $region28: #{tpu_custom_call.1} parent=23 // pred_fallthru
          _
        %s118 = sand.u32 %s26, 1
        %s119 = scalar_lea.sflag [#allocation3], %s118
        %s120 = sand.u32 %s26, 1
        %s121 = smul.addr %s120, 8
        %s122 = scalar_lea.vmem [#allocation2], %s121
        %p123 = pneg %p39
        %p124 = pneg %p36
        %p125 = pneg %p65
        %p126 = pneg %p62
        %s127 = sand.u32 %s52, 1
        %s128 = scalar_lea.sflag [#allocation4], %s127
        %s129 = sand.u32 %s52, 1
        %s130 = smul.addr %s129, 8
        %s131 = scalar_lea.vmem [#allocation5], %s130
        %v132 = vld [vmem:[%s113] sm:$0xff]
        %133 = vmax.xlane.f32.xlu0 %v132
        %v134 = vpop.xlane.xlu0 %133
        %v135 = vsub.f32 %v132, %v134
        %v136 = vmul.f32 %v135, 1.442695
        %v137 = vpow.pop %v136
        %138 = vadd.xlane.f32.xlu0 %v137
        %v139 = vpop.xlane.xlu0 %138
        %v140 = vmul.f32 %v137, %v135
        %141 = vadd.xlane.f32.xlu0 %v140
        %v142 = vpop.xlane.xlu0 %141
        %v143 = vlog2.pop %v139
        %v144 = vmul.f32 %v143, 0.6931472
        %v145 = vrcp.pop %v139
        %v146 = vmul.f32 %v142, %v145
        %v147 = vsub.f32 %v144, %v146
        %v148 = vmul.f32 %v147, %v147
        %v149 = vadd.f32 %v148, 1e-08
        %v150 = vmul.f32 %v149, %v149
        %s151 = smul.u32 %s18, 8
        %v152 = vlaneseq
        %v153 = vshrl.u32 %v152, 7
        %v154 = vstv %s151
        %v155 = vadd.s32 %v154, %v153
        %vm156 = vcmp.lt.s32.totalorder %v155, 20
        %v157 = vsel %vm156, %v150, 0.0
        %vm158 = vcmask 7168
        %v159 = vsel %vm158, %v157, 0.0
        %160 = vadd.xlane.f32.xlu0 %v159
        %v161 = vpop.xlane.xlu0 %160
        %v162 = vrot.slane %v161, 4
        %v163 = vadd.f32 %v161, %v162
        %v164 = vrot.slane %v163, 2
        %v165 = vadd.f32 %v163, %v164
        %v166 = vrot.slane %v165, 1
        %v167 = vadd.f32 %v165, %v166
        %s168 = vtos %v167
        %v169 = vstv %s168
        %170 = vst [vmem:[%s131] sm:$0xff] %v169
        %s171 = sand.u32 %s52, 1
        %s172 = scalar_lea.sflag [#allocation4], %s171
        %s173 = sand.u32 %s52, 1
        %s174 = smul.addr %s173, 8
        %s175 = scalar_lea.vmem [#allocation5], %s174
        // Predicated region
        $region29: #{tpu_custom_call.1} parent=23 // pred_check
          %p176 = pneg %p62
        $region30: #{tpu_custom_call.1} parent=23 // pred_check_branch
          %178 = sbr.rel (%p176) target = $region32
        $region31: #{tpu_custom_call.1} parent=23 // pred_region
          %s180 = ssub.s32 128, 128
          %181 = vsyncadd %s172, %s180
          %s182 = smul.addr %s18, 128
          %s183 = scalar_lea.hbm %s1, %s182
          %s185 = sshll.u32 %s175, 4
          %s186 = int_to_ptr.vmem [resolvable:$true] %s185
          %188 = dma.vmem_to_hbm [thread:$0]  %s186, 128, %s183, %s172
        $region32: #{tpu_custom_call.1} parent=23 // pred_fallthru
          _
      $region24: #{tpu_custom_call.1} parent=5 // pred_fallthru
        _
      %p189 = scmp.le.s32.totalorder 2, %s13
      // Predicated region
      $region33: #{tpu_custom_call.1} parent=5 // pred_check
        %p190 = pneg %p189
      $region34: #{tpu_custom_call.1} parent=5 // pred_check_branch
        %192 = sbr.rel (%p190) target = $region36
      $region35: #{tpu_custom_call.1} parent=5 // pred_region
        %s193 = ssub.s32 %s13, 2
        // Predicated region
        $region37: #{tpu_custom_call.1} parent=35 // pred_check
          %p194 = pneg %p68
        $region38: #{tpu_custom_call.1} parent=35 // pred_check_branch
          %196 = sbr.rel (%p194) target = $region40
        $region39: #{tpu_custom_call.1} parent=35 // pred_region
          %s197 = sand.u32 %s53, 1
          %s198 = scalar_lea.sflag [#allocation4], %s197
          %s199 = sand.u32 %s53, 1
          %s200 = smul.addr %s199, 8
          %s201 = scalar_lea.vmem [#allocation5], %s200
          %202 = dma.done %s198, 128
        $region40: #{tpu_custom_call.1} parent=35 // pred_fallthru
          _
      $region36: #{tpu_custom_call.1} parent=5 // pred_fallthru
        _
    $region6: #{tpu_custom_call.1} parent=1 // loop_footer
      %s17 = sadd.s32 1, %s13
    $region7: #{tpu_custom_call.1} parent=1 // loop_footer_branch
      %12 = sbr.rel target = $region3
    $region8: #{tpu_custom_call.1} parent=1 // loop_exit
      _
    %203 = vsyncpa [#allocation3], 1
    %s204 = scalar_lea.sflag [#allocation3], 1
    %205 = vsyncpa %s204, 1
    %206 = vsyncpa [#allocation4], 1
    %s207 = scalar_lea.sflag [#allocation4], 1
    %208 = vsyncpa %s207, 1

</llo_original>
